<compile_context>
chip_gen: v7x
topology: tpu7x:2x2x1
jax: 0.10.0
libtpu: 0.0.40
codegen_flags: <defaults>
</compile_context>

<pallas_src>
import jax
import jax.numpy as jnp
from jax import lax
from jax.experimental import pallas as pl
from jax.experimental.pallas import tpu as pltpu


def _sum_tail(x):
    """Sum over every axis except the batch axis (0), keepdims=True."""
    for ax in range(x.ndim - 1, 0, -1):
        x = jnp.sum(x, axis=ax, keepdims=True)
    return x


def _max_tail(x):
    """Max over every axis except the batch axis (0), keepdims=True."""
    for ax in range(x.ndim - 1, 0, -1):
        x = jnp.max(x, axis=ax, keepdims=True)
    return x


def _make_kd_kernel(num_layers):
    def kernel(*refs):
        lam_ref = refs[0]                                   # SMEM (1,) f32
        t_refs = refs[1:1 + num_layers]
        s_refs = refs[1 + num_layers:1 + 2 * num_layers]
        t_out_ref = refs[1 + 2 * num_layers]
        s_out_ref = refs[2 + 2 * num_layers]
        out_ref = refs[3 + 2 * num_layers]

        # ------ CE term: CrossEntropyLoss(softmax(teacher_out), softmax(student_out))
        to = t_out_ref[...].astype(jnp.float32)             # (B, C)
        so = s_out_ref[...].astype(jnp.float32)
        eto = jnp.exp(to - jnp.max(to, axis=1, keepdims=True))
        p_t = eto / jnp.sum(eto, axis=1, keepdims=True)     # CE "logits"
        eso = jnp.exp(so - jnp.max(so, axis=1, keepdims=True))
        p_s = eso / jnp.sum(eso, axis=1, keepdims=True)     # soft targets
        # CrossEntropyLoss re-applies log_softmax to its input (intentional
        # double softmax, mirroring the PyTorch module).  p_t in [0,1], so the
        # max-shift can be skipped safely.
        lse = jnp.log(jnp.sum(jnp.exp(p_t), axis=1, keepdims=True))
        ce = -jnp.sum(p_s * (p_t - lse), keepdims=True) / to.shape[0]   # (1,1)

        # ------ per-layer KL(log_softmax(student) || log_softmax(teacher)), summed
        kl_total = jnp.zeros((1, 1), jnp.float32)
        for t_ref, s_ref in zip(t_refs, s_refs):             # static unroll over L
            t = t_ref[...].astype(jnp.float32)                # (B, D//128, 128)
            s = s_ref[...].astype(jnp.float32)
            bsz = t.shape[0]

            # torch.norm(x, p=2) with no dim == Frobenius norm of the whole tensor.
            t = t * lax.rsqrt(jnp.sum(_sum_tail(t * t), axis=0, keepdims=True))
            s = s * lax.rsqrt(jnp.sum(_sum_tail(s * s), axis=0, keepdims=True))

            zt = t - _max_tail(t)
            zs = s - _max_tail(s)
            et = jnp.exp(zt)
            st = _sum_tail(et)                                # (B,1,1)
            ss = _sum_tail(jnp.exp(zs))                       # (B,1,1)
            num = _sum_tail(et * (zt - zs))                   # (B,1,1)

            # KLDivLoss(log_target=True, reduction='batchmean'):
            #   sum(p_t * (log p_t - log p_s)) / B
            #   = sum_rows( num/st + log(ss/st) ) / B
            kl_rows = num / st + jnp.log(ss / st)             # (B,1,1)
            kl_total = kl_total + jnp.sum(kl_rows, axis=0) / bsz   # (1,1)

        lam = lam_ref[0]                                      # scalar from SMEM
        out_ref[...] = (1.0 - lam) * kl_total + lam * ce

    return kernel


def attention_aware_kd_loss(teacher_layers, teacher_out, student_layers,
                            student_out, llambda):
    """JAX/Pallas equivalent of AttentionAwareKDLoss.forward (single fused kernel)."""
    num_layers = len(teacher_layers)
    assert num_layers == len(student_layers)

    def _prep(x):
        # (B, S, S) -> (B, S*S), then pack D onto sublanes+lanes for vreg density.
        b = x.shape[0]
        x = x.reshape(b, -1)                        # contiguous, free
        d = x.shape[1]
        if d % 128 == 0:
            return x.reshape(b, d // 128, 128)
        return x.reshape(b, 1, d)

    t_prepped = [_prep(x) for x in teacher_layers]
    s_prepped = [_prep(x) for x in student_layers]

    lam = jnp.asarray(llambda, jnp.float32).reshape(1)

    in_specs = (
        [pl.BlockSpec(memory_space=pltpu.MemorySpace.SMEM)]                 # llambda
        + [pl.BlockSpec(memory_space=pltpu.MemorySpace.VMEM)] * num_layers  # teacher layers
        + [pl.BlockSpec(memory_space=pltpu.MemorySpace.VMEM)] * num_layers  # student layers
        + [pl.BlockSpec(memory_space=pltpu.MemorySpace.VMEM),               # teacher_out
           pl.BlockSpec(memory_space=pltpu.MemorySpace.VMEM)]               # student_out
    )

    out = pl.pallas_call(
        _make_kd_kernel(num_layers),
        out_shape=jax.ShapeDtypeStruct((1, 1), jnp.float32),
        in_specs=in_specs,
        out_specs=pl.BlockSpec(memory_space=pltpu.MemorySpace.VMEM),
        compiler_params=pltpu.CompilerParams(
            # 48 MiB is safe on all of v5e/v6e/v7x (v7x physical VMEM is 64 MiB);
            # raise toward ~100 MiB on v5e/v6e once the D-tiled path lands.
            vmem_limit_bytes=48 * 1024 * 1024,
        ),
    )(lam, *t_prepped, *s_prepped, teacher_out, student_out)
    return out[0, 0]


if __name__ == "__main__":
    key = jax.random.PRNGKey(0)
    B, S, C = 2, 16, 8          # batch, attention-map side, num classes
    k1, k2, k3, k4, k5, k6 = jax.random.split(key, 6)

    # two attention-map layers per model: shape [B, S, S]
    teacher_layers = [
        jax.random.normal(k1, (B, S, S), jnp.float32),
        jax.random.normal(k2, (B, S, S), jnp.float32),
    ]
    student_layers = [
        jax.random.normal(k3, (B, S, S), jnp.float32),
        jax.random.normal(k4, (B, S, S), jnp.float32),
    ]
    teacher_out = jax.random.normal(k5, (B, C), jnp.float32)
    student_out = jax.random.normal(k6, (B, C), jnp.float32)

    # deterministic parameter init: llambda = 0.5 (matches nn.Parameter(torch.tensor(0.5)))
    llambda = jnp.asarray(0.5, dtype=jnp.float32)

    loss_fn = jax.jit(attention_aware_kd_loss)
    loss = loss_fn(teacher_layers, teacher_out, student_layers, student_out,
                   llambda)
    jax.block_until_ready(loss)
    print("KERNEL_OK")
</pallas_src>

<mosaic_0001>
module attributes {stable_mosaic.version = 11 : i64} {
  func.func @kernel(%arg0: memref<1xf32, #tpu.memory_space<smem>>, %arg1: memref<2x2x128xf32, #tpu.memory_space<vmem>>, %arg2: memref<2x2x128xf32, #tpu.memory_space<vmem>>, %arg3: memref<2x2x128xf32, #tpu.memory_space<vmem>>, %arg4: memref<2x2x128xf32, #tpu.memory_space<vmem>>, %arg5: memref<2x8xf32, #tpu.memory_space<vmem>>, %arg6: memref<2x8xf32, #tpu.memory_space<vmem>>, %arg7: memref<1x1xf32, #tpu.memory_space<vmem>>) attributes {dimension_semantics = [], scalar_prefetch = 0 : i64, scratch_operands = 0 : i64, tpu.core_type = #tpu.core_type<tc>} {
    %c0 = arith.constant 0 : index
    %c0_0 = arith.constant 0 : index
    %0 = vector.load %arg5[%c0, %c0_0] : memref<2x8xf32, #tpu.memory_space<vmem>>, vector<2x8xf32>
    %c0_1 = arith.constant 0 : index
    %c0_2 = arith.constant 0 : index
    %1 = vector.load %arg6[%c0_1, %c0_2] : memref<2x8xf32, #tpu.memory_space<vmem>>, vector<2x8xf32>
    %cst = arith.constant dense<0xFF800000> : vector<2xf32>
    %2 = vector.multi_reduction <maximumf>, %0, %cst [1] : vector<2x8xf32> to vector<2xf32>
    %3 = vector.shape_cast %2 : vector<2xf32> to vector<2x1xf32>
    %4 = vector.broadcast %3 : vector<2x1xf32> to vector<2x8xf32>
    %5 = arith.subf %0, %4 : vector<2x8xf32>
    %6 = math.exp %5 : vector<2x8xf32>
    %cst_3 = arith.constant dense<0.000000e+00> : vector<2xf32>
    %7 = vector.multi_reduction <add>, %6, %cst_3 [1] : vector<2x8xf32> to vector<2xf32>
    %8 = vector.shape_cast %7 : vector<2xf32> to vector<2x1xf32>
    %9 = vector.broadcast %8 : vector<2x1xf32> to vector<2x8xf32>
    %10 = arith.divf %6, %9 : vector<2x8xf32>
    %cst_4 = arith.constant dense<0xFF800000> : vector<2xf32>
    %11 = vector.multi_reduction <maximumf>, %1, %cst_4 [1] : vector<2x8xf32> to vector<2xf32>
    %12 = vector.shape_cast %11 : vector<2xf32> to vector<2x1xf32>
    %13 = vector.broadcast %12 : vector<2x1xf32> to vector<2x8xf32>
    %14 = arith.subf %1, %13 : vector<2x8xf32>
    %15 = math.exp %14 : vector<2x8xf32>
    %cst_5 = arith.constant dense<0.000000e+00> : vector<2xf32>
    %16 = vector.multi_reduction <add>, %15, %cst_5 [1] : vector<2x8xf32> to vector<2xf32>
    %17 = vector.shape_cast %16 : vector<2xf32> to vector<2x1xf32>
    %18 = vector.broadcast %17 : vector<2x1xf32> to vector<2x8xf32>
    %19 = arith.divf %15, %18 : vector<2x8xf32>
    %20 = math.exp %10 : vector<2x8xf32>
    %cst_6 = arith.constant dense<0.000000e+00> : vector<2xf32>
    %21 = vector.multi_reduction <add>, %20, %cst_6 [1] : vector<2x8xf32> to vector<2xf32>
    %22 = vector.shape_cast %21 : vector<2xf32> to vector<2x1xf32>
    %23 = math.log %22 : vector<2x1xf32>
    %24 = vector.broadcast %23 : vector<2x1xf32> to vector<2x8xf32>
    %25 = arith.subf %10, %24 : vector<2x8xf32>
    %26 = arith.mulf %19, %25 : vector<2x8xf32>
    %27 = vector.shape_cast %26 : vector<2x8xf32> to vector<1x2x8xf32>
    %cst_7 = arith.constant dense<0.000000e+00> : vector<1xf32>
    %28 = vector.multi_reduction <add>, %27, %cst_7 [1, 2] : vector<1x2x8xf32> to vector<1xf32>
    %29 = vector.shape_cast %28 : vector<1xf32> to vector<1x1x1xf32>
    %30 = vector.extract %29[0, 0, 0] : f32 from vector<1x1x1xf32>
    %31 = vector.broadcast %30 : f32 to vector<1x1xf32>
    %cst_8 = arith.constant 0.000000e+00 : f32
    %32 = vector.broadcast %cst_8 : f32 to vector<1x1xf32>
    %33 = arith.subf %32, %31 : vector<1x1xf32>
    %cst_9 = arith.constant 2.000000e+00 : f32
    %34 = vector.broadcast %cst_9 : f32 to vector<1x1xf32>
    %35 = arith.divf %33, %34 : vector<1x1xf32>
    %cst_10 = arith.constant 0.000000e+00 : f32
    %36 = vector.broadcast %cst_10 : f32 to vector<1x1xf32>
    %c0_11 = arith.constant 0 : index
    %c0_12 = arith.constant 0 : index
    %c0_13 = arith.constant 0 : index
    %37 = vector.load %arg1[%c0_11, %c0_12, %c0_13] : memref<2x2x128xf32, #tpu.memory_space<vmem>>, vector<2x2x128xf32>
    %c0_14 = arith.constant 0 : index
    %c0_15 = arith.constant 0 : index
    %c0_16 = arith.constant 0 : index
    %38 = vector.load %arg3[%c0_14, %c0_15, %c0_16] : memref<2x2x128xf32, #tpu.memory_space<vmem>>, vector<2x2x128xf32>
    %39 = arith.mulf %37, %37 : vector<2x2x128xf32>
    %cst_17 = arith.constant dense<0.000000e+00> : vector<2x2xf32>
    %40 = vector.multi_reduction <add>, %39, %cst_17 [2] : vector<2x2x128xf32> to vector<2x2xf32>
    %41 = vector.shape_cast %40 : vector<2x2xf32> to vector<2x2x1xf32>
    %cst_18 = arith.constant dense<0.000000e+00> : vector<2x1xf32>
    %42 = vector.multi_reduction <add>, %41, %cst_18 [1] : vector<2x2x1xf32> to vector<2x1xf32>
    %43 = vector.shape_cast %42 : vector<2x1xf32> to vector<2x1x1xf32>
    %cst_19 = arith.constant dense<0.000000e+00> : vector<1x1xf32>
    %44 = vector.multi_reduction <add>, %43, %cst_19 [0] : vector<2x1x1xf32> to vector<1x1xf32>
    %45 = vector.shape_cast %44 : vector<1x1xf32> to vector<1x1x1xf32>
    %46 = math.rsqrt %45 : vector<1x1x1xf32>
    %47 = vector.broadcast %46 : vector<1x1x1xf32> to vector<2x2x128xf32>
    %48 = arith.mulf %37, %47 : vector<2x2x128xf32>
    %49 = arith.mulf %38, %38 : vector<2x2x128xf32>
    %cst_20 = arith.constant dense<0.000000e+00> : vector<2x2xf32>
    %50 = vector.multi_reduction <add>, %49, %cst_20 [2] : vector<2x2x128xf32> to vector<2x2xf32>
    %51 = vector.shape_cast %50 : vector<2x2xf32> to vector<2x2x1xf32>
    %cst_21 = arith.constant dense<0.000000e+00> : vector<2x1xf32>
    %52 = vector.multi_reduction <add>, %51, %cst_21 [1] : vector<2x2x1xf32> to vector<2x1xf32>
    %53 = vector.shape_cast %52 : vector<2x1xf32> to vector<2x1x1xf32>
    %cst_22 = arith.constant dense<0.000000e+00> : vector<1x1xf32>
    %54 = vector.multi_reduction <add>, %53, %cst_22 [0] : vector<2x1x1xf32> to vector<1x1xf32>
    %55 = vector.shape_cast %54 : vector<1x1xf32> to vector<1x1x1xf32>
    %56 = math.rsqrt %55 : vector<1x1x1xf32>
    %57 = vector.broadcast %56 : vector<1x1x1xf32> to vector<2x2x128xf32>
    %58 = arith.mulf %38, %57 : vector<2x2x128xf32>
    %cst_23 = arith.constant dense<0xFF800000> : vector<2x2xf32>
    %59 = vector.multi_reduction <maximumf>, %48, %cst_23 [2] : vector<2x2x128xf32> to vector<2x2xf32>
    %60 = vector.shape_cast %59 : vector<2x2xf32> to vector<2x2x1xf32>
    %cst_24 = arith.constant dense<0xFF800000> : vector<2x1xf32>
    %61 = vector.multi_reduction <maximumf>, %60, %cst_24 [1] : vector<2x2x1xf32> to vector<2x1xf32>
    %62 = vector.shape_cast %61 : vector<2x1xf32> to vector<2x1x1xf32>
    %63 = vector.broadcast %62 : vector<2x1x1xf32> to vector<2x2x128xf32>
    %64 = arith.subf %48, %63 : vector<2x2x128xf32>
    %cst_25 = arith.constant dense<0xFF800000> : vector<2x2xf32>
    %65 = vector.multi_reduction <maximumf>, %58, %cst_25 [2] : vector<2x2x128xf32> to vector<2x2xf32>
    %66 = vector.shape_cast %65 : vector<2x2xf32> to vector<2x2x1xf32>
    %cst_26 = arith.constant dense<0xFF800000> : vector<2x1xf32>
    %67 = vector.multi_reduction <maximumf>, %66, %cst_26 [1] : vector<2x2x1xf32> to vector<2x1xf32>
    %68 = vector.shape_cast %67 : vector<2x1xf32> to vector<2x1x1xf32>
    %69 = vector.broadcast %68 : vector<2x1x1xf32> to vector<2x2x128xf32>
    %70 = arith.subf %58, %69 : vector<2x2x128xf32>
    %71 = math.exp %64 : vector<2x2x128xf32>
    %cst_27 = arith.constant dense<0.000000e+00> : vector<2x2xf32>
    %72 = vector.multi_reduction <add>, %71, %cst_27 [2] : vector<2x2x128xf32> to vector<2x2xf32>
    %73 = vector.shape_cast %72 : vector<2x2xf32> to vector<2x2x1xf32>
    %cst_28 = arith.constant dense<0.000000e+00> : vector<2x1xf32>
    %74 = vector.multi_reduction <add>, %73, %cst_28 [1] : vector<2x2x1xf32> to vector<2x1xf32>
    %75 = vector.shape_cast %74 : vector<2x1xf32> to vector<2x1x1xf32>
    %76 = math.exp %70 : vector<2x2x128xf32>
    %cst_29 = arith.constant dense<0.000000e+00> : vector<2x2xf32>
    %77 = vector.multi_reduction <add>, %76, %cst_29 [2] : vector<2x2x128xf32> to vector<2x2xf32>
    %78 = vector.shape_cast %77 : vector<2x2xf32> to vector<2x2x1xf32>
    %cst_30 = arith.constant dense<0.000000e+00> : vector<2x1xf32>
    %79 = vector.multi_reduction <add>, %78, %cst_30 [1] : vector<2x2x1xf32> to vector<2x1xf32>
    %80 = vector.shape_cast %79 : vector<2x1xf32> to vector<2x1x1xf32>
    %81 = arith.subf %64, %70 : vector<2x2x128xf32>
    %82 = arith.mulf %71, %81 : vector<2x2x128xf32>
    %cst_31 = arith.constant dense<0.000000e+00> : vector<2x2xf32>
    %83 = vector.multi_reduction <add>, %82, %cst_31 [2] : vector<2x2x128xf32> to vector<2x2xf32>
    %84 = vector.shape_cast %83 : vector<2x2xf32> to vector<2x2x1xf32>
    %cst_32 = arith.constant dense<0.000000e+00> : vector<2x1xf32>
    %85 = vector.multi_reduction <add>, %84, %cst_32 [1] : vector<2x2x1xf32> to vector<2x1xf32>
    %86 = vector.shape_cast %85 : vector<2x1xf32> to vector<2x1x1xf32>
    %87 = arith.divf %86, %75 : vector<2x1x1xf32>
    %88 = arith.divf %80, %75 : vector<2x1x1xf32>
    %89 = math.log %88 : vector<2x1x1xf32>
    %90 = arith.addf %87, %89 : vector<2x1x1xf32>
    %cst_33 = arith.constant dense<0.000000e+00> : vector<1x1xf32>
    %91 = vector.multi_reduction <add>, %90, %cst_33 [0] : vector<2x1x1xf32> to vector<1x1xf32>
    %cst_34 = arith.constant 2.000000e+00 : f32
    %92 = vector.broadcast %cst_34 : f32 to vector<1x1xf32>
    %93 = arith.divf %91, %92 : vector<1x1xf32>
    %94 = arith.addf %36, %93 : vector<1x1xf32>
    %c0_35 = arith.constant 0 : index
    %c0_36 = arith.constant 0 : index
    %c0_37 = arith.constant 0 : index
    %95 = vector.load %arg2[%c0_35, %c0_36, %c0_37] : memref<2x2x128xf32, #tpu.memory_space<vmem>>, vector<2x2x128xf32>
    %c0_38 = arith.constant 0 : index
    %c0_39 = arith.constant 0 : index
    %c0_40 = arith.constant 0 : index
    %96 = vector.load %arg4[%c0_38, %c0_39, %c0_40] : memref<2x2x128xf32, #tpu.memory_space<vmem>>, vector<2x2x128xf32>
    %97 = arith.mulf %95, %95 : vector<2x2x128xf32>
    %cst_41 = arith.constant dense<0.000000e+00> : vector<2x2xf32>
    %98 = vector.multi_reduction <add>, %97, %cst_41 [2] : vector<2x2x128xf32> to vector<2x2xf32>
    %99 = vector.shape_cast %98 : vector<2x2xf32> to vector<2x2x1xf32>
    %cst_42 = arith.constant dense<0.000000e+00> : vector<2x1xf32>
    %100 = vector.multi_reduction <add>, %99, %cst_42 [1] : vector<2x2x1xf32> to vector<2x1xf32>
    %101 = vector.shape_cast %100 : vector<2x1xf32> to vector<2x1x1xf32>
    %cst_43 = arith.constant dense<0.000000e+00> : vector<1x1xf32>
    %102 = vector.multi_reduction <add>, %101, %cst_43 [0] : vector<2x1x1xf32> to vector<1x1xf32>
    %103 = vector.shape_cast %102 : vector<1x1xf32> to vector<1x1x1xf32>
    %104 = math.rsqrt %103 : vector<1x1x1xf32>
    %105 = vector.broadcast %104 : vector<1x1x1xf32> to vector<2x2x128xf32>
    %106 = arith.mulf %95, %105 : vector<2x2x128xf32>
    %107 = arith.mulf %96, %96 : vector<2x2x128xf32>
    %cst_44 = arith.constant dense<0.000000e+00> : vector<2x2xf32>
    %108 = vector.multi_reduction <add>, %107, %cst_44 [2] : vector<2x2x128xf32> to vector<2x2xf32>
    %109 = vector.shape_cast %108 : vector<2x2xf32> to vector<2x2x1xf32>
    %cst_45 = arith.constant dense<0.000000e+00> : vector<2x1xf32>
    %110 = vector.multi_reduction <add>, %109, %cst_45 [1] : vector<2x2x1xf32> to vector<2x1xf32>
    %111 = vector.shape_cast %110 : vector<2x1xf32> to vector<2x1x1xf32>
    %cst_46 = arith.constant dense<0.000000e+00> : vector<1x1xf32>
    %112 = vector.multi_reduction <add>, %111, %cst_46 [0] : vector<2x1x1xf32> to vector<1x1xf32>
    %113 = vector.shape_cast %112 : vector<1x1xf32> to vector<1x1x1xf32>
    %114 = math.rsqrt %113 : vector<1x1x1xf32>
    %115 = vector.broadcast %114 : vector<1x1x1xf32> to vector<2x2x128xf32>
    %116 = arith.mulf %96, %115 : vector<2x2x128xf32>
    %cst_47 = arith.constant dense<0xFF800000> : vector<2x2xf32>
    %117 = vector.multi_reduction <maximumf>, %106, %cst_47 [2] : vector<2x2x128xf32> to vector<2x2xf32>
    %118 = vector.shape_cast %117 : vector<2x2xf32> to vector<2x2x1xf32>
    %cst_48 = arith.constant dense<0xFF800000> : vector<2x1xf32>
    %119 = vector.multi_reduction <maximumf>, %118, %cst_48 [1] : vector<2x2x1xf32> to vector<2x1xf32>
    %120 = vector.shape_cast %119 : vector<2x1xf32> to vector<2x1x1xf32>
    %121 = vector.broadcast %120 : vector<2x1x1xf32> to vector<2x2x128xf32>
    %122 = arith.subf %106, %121 : vector<2x2x128xf32>
    %cst_49 = arith.constant dense<0xFF800000> : vector<2x2xf32>
    %123 = vector.multi_reduction <maximumf>, %116, %cst_49 [2] : vector<2x2x128xf32> to vector<2x2xf32>
    %124 = vector.shape_cast %123 : vector<2x2xf32> to vector<2x2x1xf32>
    %cst_50 = arith.constant dense<0xFF800000> : vector<2x1xf32>
    %125 = vector.multi_reduction <maximumf>, %124, %cst_50 [1] : vector<2x2x1xf32> to vector<2x1xf32>
    %126 = vector.shape_cast %125 : vector<2x1xf32> to vector<2x1x1xf32>
    %127 = vector.broadcast %126 : vector<2x1x1xf32> to vector<2x2x128xf32>
    %128 = arith.subf %116, %127 : vector<2x2x128xf32>
    %129 = math.exp %122 : vector<2x2x128xf32>
    %cst_51 = arith.constant dense<0.000000e+00> : vector<2x2xf32>
    %130 = vector.multi_reduction <add>, %129, %cst_51 [2] : vector<2x2x128xf32> to vector<2x2xf32>
    %131 = vector.shape_cast %130 : vector<2x2xf32> to vector<2x2x1xf32>
    %cst_52 = arith.constant dense<0.000000e+00> : vector<2x1xf32>
    %132 = vector.multi_reduction <add>, %131, %cst_52 [1] : vector<2x2x1xf32> to vector<2x1xf32>
    %133 = vector.shape_cast %132 : vector<2x1xf32> to vector<2x1x1xf32>
    %134 = math.exp %128 : vector<2x2x128xf32>
    %cst_53 = arith.constant dense<0.000000e+00> : vector<2x2xf32>
    %135 = vector.multi_reduction <add>, %134, %cst_53 [2] : vector<2x2x128xf32> to vector<2x2xf32>
    %136 = vector.shape_cast %135 : vector<2x2xf32> to vector<2x2x1xf32>
    %cst_54 = arith.constant dense<0.000000e+00> : vector<2x1xf32>
    %137 = vector.multi_reduction <add>, %136, %cst_54 [1] : vector<2x2x1xf32> to vector<2x1xf32>
    %138 = vector.shape_cast %137 : vector<2x1xf32> to vector<2x1x1xf32>
    %139 = arith.subf %122, %128 : vector<2x2x128xf32>
    %140 = arith.mulf %129, %139 : vector<2x2x128xf32>
    %cst_55 = arith.constant dense<0.000000e+00> : vector<2x2xf32>
    %141 = vector.multi_reduction <add>, %140, %cst_55 [2] : vector<2x2x128xf32> to vector<2x2xf32>
    %142 = vector.shape_cast %141 : vector<2x2xf32> to vector<2x2x1xf32>
    %cst_56 = arith.constant dense<0.000000e+00> : vector<2x1xf32>
    %143 = vector.multi_reduction <add>, %142, %cst_56 [1] : vector<2x2x1xf32> to vector<2x1xf32>
    %144 = vector.shape_cast %143 : vector<2x1xf32> to vector<2x1x1xf32>
    %145 = arith.divf %144, %133 : vector<2x1x1xf32>
    %146 = arith.divf %138, %133 : vector<2x1x1xf32>
    %147 = math.log %146 : vector<2x1x1xf32>
    %148 = arith.addf %145, %147 : vector<2x1x1xf32>
    %cst_57 = arith.constant dense<0.000000e+00> : vector<1x1xf32>
    %149 = vector.multi_reduction <add>, %148, %cst_57 [0] : vector<2x1x1xf32> to vector<1x1xf32>
    %cst_58 = arith.constant 2.000000e+00 : f32
    %150 = vector.broadcast %cst_58 : f32 to vector<1x1xf32>
    %151 = arith.divf %149, %150 : vector<1x1xf32>
    %152 = arith.addf %94, %151 : vector<1x1xf32>
    %c0_59 = arith.constant 0 : index
    %153 = memref.load %arg0[%c0_59] : memref<1xf32, #tpu.memory_space<smem>>
    %cst_60 = arith.constant 1.000000e+00 : f32
    %154 = arith.subf %cst_60, %153 : f32
    %155 = vector.broadcast %154 : f32 to vector<1x1xf32>
    %156 = arith.mulf %155, %152 : vector<1x1xf32>
    %157 = vector.broadcast %153 : f32 to vector<1x1xf32>
    %158 = arith.mulf %157, %35 : vector<1x1xf32>
    %159 = arith.addf %156, %158 : vector<1x1xf32>
    %c0_61 = arith.constant 0 : index
    %c0_62 = arith.constant 0 : index
    %160 = vector.load %arg7[%c0_61, %c0_62] : memref<1x1xf32, #tpu.memory_space<vmem>>, vector<1x1xf32>
    tpu.vector_store %arg7[%c0_61, %c0_62], %159 {strides = array<i32>} : memref<1x1xf32, #tpu.memory_space<vmem>>, vector<1x1xf32>,
    return
  }
}

</mosaic_0001>

<llo_original>
// kernel: attention_aware_kd_loss.1
$region0: #{attention_aware_kd_loss.1}
  #allocation0 [shape = 'u32[]', space=smem, size = 0x4, offset = 0x4, fixed_abs, tag = 'smem constant byte address 0x4 - core index']
  #allocation1 [shape = 'u32[144,128]{1,0:T(1,128)}', space=vmem, size = 0x12000, scoped, tag = 'internal scratch']
  #allocation2 [shape = 'f32[1]{0:T(128)S(6)}', space=smem, size = 0x200, scoped, tag = 'scoped memory for attention_aware_kd_loss.1']
  %s0 = inlined_call_operand.<no memory space> [shape: f32[1], index: 0, kind: input, shape index: {}]
  %s1 = inlined_call_operand.vmem [shape: f32[2,2,128], index: 1, kind: input, shape index: {}]
  %s2 = inlined_call_operand.vmem [shape: f32[2,2,128], index: 2, kind: input, shape index: {}]
  %s3 = inlined_call_operand.vmem [shape: f32[2,2,128], index: 3, kind: input, shape index: {}]
  %s4 = inlined_call_operand.vmem [shape: f32[2,2,128], index: 4, kind: input, shape index: {}]
  %s5 = inlined_call_operand.vmem [shape: f32[2,8], index: 5, kind: input, shape index: {}]
  %s6 = inlined_call_operand.vmem [shape: f32[2,8], index: 6, kind: input, shape index: {}]
  %s7 = inlined_call_operand.hbm [shape: f32[1,1], index: 7, kind: output, shape index: {}]
  %s8 = sld [smem:[#allocation0]]
  $region38: #{attention_aware_kd_loss.1} parent=0
    _
  %s10 = ssub.s32 1, %s8
  %s11 = scalar_select 0, %s10, %s8
  %12 = sst [smem:[#allocation2]] %s0
  $region1: #{attention_aware_kd_loss.1} parent=0
    #allocation3 [shape = 'u8[512]{0}', space=vmem, size = 0x400, scoped, tag = 'output window, operand 0, single buffered']
    #allocation4 [shape = 's32[1]{0}', space=sflag, size = 0x4, scoped, tag = 'scoped memory for attention_aware_kd_loss.1']
    %13 = vsyncpa [#allocation4], 0
    // Predicated region
    $region2: #{attention_aware_kd_loss.1} parent=1 // pred_check
      _
    $region3: #{attention_aware_kd_loss.1} parent=1 // pred_check_branch
      %15 = sbr.rel (0) target = $region5
    $region4: #{attention_aware_kd_loss.1} parent=1 // pred_region
      _
    $region5: #{attention_aware_kd_loss.1} parent=1 // pred_fallthru
      _
    // Predicated region
    $region6: #{attention_aware_kd_loss.1} parent=1 // pred_check
      _
    $region7: #{attention_aware_kd_loss.1} parent=1 // pred_check_branch
      %17 = sbr.rel (0) target = $region9
    $region8: #{attention_aware_kd_loss.1} parent=1 // pred_region
      _
    $region9: #{attention_aware_kd_loss.1} parent=1 // pred_fallthru
      _
    // Predicated region
    $region10: #{attention_aware_kd_loss.1} parent=1 // pred_check
      _
    $region11: #{attention_aware_kd_loss.1} parent=1 // pred_check_branch
      %19 = sbr.rel (0) target = $region13
    $region12: #{attention_aware_kd_loss.1} parent=1 // pred_region
      _
    $region13: #{attention_aware_kd_loss.1} parent=1 // pred_fallthru
      _
    // Predicated region
    $region14: #{attention_aware_kd_loss.1} parent=1 // pred_check
      _
    $region15: #{attention_aware_kd_loss.1} parent=1 // pred_check_branch
      %21 = sbr.rel (0) target = $region17
    $region16: #{attention_aware_kd_loss.1} parent=1 // pred_region
      _
    $region17: #{attention_aware_kd_loss.1} parent=1 // pred_fallthru
      _
    // Predicated region
    $region18: #{attention_aware_kd_loss.1} parent=1 // pred_check
      _
    $region19: #{attention_aware_kd_loss.1} parent=1 // pred_check_branch
      %23 = sbr.rel (0) target = $region21
    $region20: #{attention_aware_kd_loss.1} parent=1 // pred_region
      _
    $region21: #{attention_aware_kd_loss.1} parent=1 // pred_fallthru
      _
    // Predicated region
    $region22: #{attention_aware_kd_loss.1} parent=1 // pred_check
      _
    $region23: #{attention_aware_kd_loss.1} parent=1 // pred_check_branch
      %25 = sbr.rel (0) target = $region25
    $region24: #{attention_aware_kd_loss.1} parent=1 // pred_region
      _
    $region25: #{attention_aware_kd_loss.1} parent=1 // pred_fallthru
      _
    // Predicated region
    $region26: #{attention_aware_kd_loss.1} parent=1 // pred_check
      _
    $region27: #{attention_aware_kd_loss.1} parent=1 // pred_check_branch
      %27 = sbr.rel (0) target = $region29
    $region28: #{attention_aware_kd_loss.1} parent=1 // pred_region
      _
    $region29: #{attention_aware_kd_loss.1} parent=1 // pred_fallthru
      _
    %v28 = vld [vmem:[%s5] sm:$0x3]
    %v29 = vld [vmem:[%s6] sm:$0x3]
    %vm30 = vcmask 58368
    %v31 = vsel %vm30, %v28, -inf
    %32 = vmax.xlane.f32.xlu0 %v31
    %v33 = vpop.xlane.xlu0 %32
    %v34 = vsub.f32 %v28, %v33
    %v35 = vmul.f32 %v34, 1.442695
    %v36 = vpow.pop %v35
    %v37 = vsel %vm30, %v36, 0.0
    %38 = vadd.xlane.f32.xlu0 %v37
    %v39 = vpop.xlane.xlu0 %38
    %v40 = vrcp.pop %v39
    %v41 = vmul.f32 %v36, %v40
    %v42 = vsel %vm30, %v29, -inf
    %43 = vmax.xlane.f32.xlu0 %v42
    %v44 = vpop.xlane.xlu0 %43
    %v45 = vsub.f32 %v29, %v44
    %v46 = vmul.f32 %v45, 1.442695
    %v47 = vpow.pop %v46
    %v48 = vsel %vm30, %v47, 0.0
    %49 = vadd.xlane.f32.xlu0 %v48
    %v50 = vpop.xlane.xlu0 %49
    %v51 = vrcp.pop %v50
    %v52 = vmul.f32 %v47, %v51
    %v53 = vmul.f32 %v41, 1.442695
    %v54 = vpow.pop %v53
    %v55 = vsel %vm30, %v54, 0.0
    %56 = vadd.xlane.f32.xlu0 %v55
    %v57 = vpop.xlane.xlu0 %56
    %v58 = vlog2.pop %v57
    %v59 = vmul.f32 %v58, 0.6931472
    %v60 = vsub.f32 %v41, %v59
    %v61 = vmul.f32 %v52, %v60
    %v62 = vsel %vm30, %v61, 0.0
    %63 = vadd.xlane.f32.xlu0 %v62
    %v64 = vpop.xlane.xlu0 %63
    %v65 = vrot.slane %v64, 4
    %v66 = vadd.f32 %v64, %v65
    %v67 = vrot.slane %v66, 2
    %v68 = vadd.f32 %v66, %v67
    %v69 = vrot.slane %v68, 1
    %v70 = vadd.f32 %v68, %v69
    %s71 = vtos %v70
    %v72 = vstv %s71
    %v73 = vsub.f32 0.0, %v72
    %v74 = vrcp.pop 2.0
    %v75 = vmul.f32 %v73, %v74
    %v76 = vld [vmem:[%s1] sm:$0x3]
    %v77 = vld [vmem:[%s1 + $0x2] sm:$0x3]
    %v78 = vld [vmem:[%s3] sm:$0x3]
    %v79 = vld [vmem:[%s3 + $0x2] sm:$0x3]
    %v80 = vmul.f32 %v76, %v76
    %v81 = vmul.f32 %v77, %v77
    %vm82 = vcmask 1041408
    %v83 = vsel %vm82, %v80, 0.0
    %84 = vadd.xlane.f32.xlu0 %v83
    %v85 = vpop.xlane.xlu0 %84
    %v86 = vsel %vm82, %v81, 0.0
    %87 = vadd.xlane.f32.xlu0 %v86
    %v88 = vpop.xlane.xlu0 %87
    %v89 = vsel %vm82, %v85, 0.0
    %v90 = vrot.slane %v89, 4
    %v91 = vadd.f32 %v89, %v90
    %v92 = vrot.slane %v91, 2
    %v93 = vadd.f32 %v91, %v92
    %v94 = vrot.slane %v93, 1
    %v95 = vadd.f32 %v93, %v94
    %v96 = vsel %vm82, %v88, 0.0
    %v97 = vrot.slane %v96, 4
    %v98 = vadd.f32 %v96, %v97
    %v99 = vrot.slane %v98, 2
    %v100 = vadd.f32 %v98, %v99
    %v101 = vrot.slane %v100, 1
    %v102 = vadd.f32 %v100, %v101
    %v103 = vadd.f32 %v95, %v102
    %v104 = vrsqrt.pop %v103
    %v105 = vmul.f32 %v76, %v104
    %v106 = vmul.f32 %v77, %v104
    %v107 = vmul.f32 %v78, %v78
    %v108 = vmul.f32 %v79, %v79
    %v109 = vsel %vm82, %v107, 0.0
    %110 = vadd.xlane.f32.xlu0 %v109
    %v111 = vpop.xlane.xlu0 %110
    %v112 = vsel %vm82, %v108, 0.0
    %113 = vadd.xlane.f32.xlu0 %v112
    %v114 = vpop.xlane.xlu0 %113
    %v115 = vsel %vm82, %v111, 0.0
    %v116 = vrot.slane %v115, 4
    %v117 = vadd.f32 %v115, %v116
    %v118 = vrot.slane %v117, 2
    %v119 = vadd.f32 %v117, %v118
    %v120 = vrot.slane %v119, 1
    %v121 = vadd.f32 %v119, %v120
    %v122 = vsel %vm82, %v114, 0.0
    %v123 = vrot.slane %v122, 4
    %v124 = vadd.f32 %v122, %v123
    %v125 = vrot.slane %v124, 2
    %v126 = vadd.f32 %v124, %v125
    %v127 = vrot.slane %v126, 1
    %v128 = vadd.f32 %v126, %v127
    %v129 = vadd.f32 %v121, %v128
    %v130 = vrsqrt.pop %v129
    %v131 = vmul.f32 %v78, %v130
    %v132 = vmul.f32 %v79, %v130
    %v133 = vsel %vm82, %v105, -inf
    %134 = vmax.xlane.f32.xlu0 %v133
    %v135 = vpop.xlane.xlu0 %134
    %v136 = vsel %vm82, %v106, -inf
    %137 = vmax.xlane.f32.xlu0 %v136
    %v138 = vpop.xlane.xlu0 %137
    %v139 = vsel %vm82, %v135, -inf
    %v140 = vrot.slane %v139, 4
    %v141 = vmax.f32 %v139, %v140
    %v142 = vrot.slane %v141, 2
    %v143 = vmax.f32 %v141, %v142
    %v144 = vrot.slane %v143, 1
    %v145 = vmax.f32 %v143, %v144
    %v146 = vsel %vm82, %v138, -inf
    %v147 = vrot.slane %v146, 4
    %v148 = vmax.f32 %v146, %v147
    %v149 = vrot.slane %v148, 2
    %v150 = vmax.f32 %v148, %v149
    %v151 = vrot.slane %v150, 1
    %v152 = vmax.f32 %v150, %v151
    %v153 = vsub.f32 %v105, %v145
    %v154 = vsub.f32 %v106, %v152
    %v155 = vsel %vm82, %v131, -inf
    %156 = vmax.xlane.f32.xlu0 %v155
    %v157 = vpop.xlane.xlu0 %156
    %v158 = vsel %vm82, %v132, -inf
    %159 = vmax.xlane.f32.xlu0 %v158
    %v160 = vpop.xlane.xlu0 %159
    %v161 = vsel %vm82, %v157, -inf
    %v162 = vrot.slane %v161, 4
    %v163 = vmax.f32 %v161, %v162
    %v164 = vrot.slane %v163, 2
    %v165 = vmax.f32 %v163, %v164
    %v166 = vrot.slane %v165, 1
    %v167 = vmax.f32 %v165, %v166
    %v168 = vsel %vm82, %v160, -inf
    %v169 = vrot.slane %v168, 4
    %v170 = vmax.f32 %v168, %v169
    %v171 = vrot.slane %v170, 2
    %v172 = vmax.f32 %v170, %v171
    %v173 = vrot.slane %v172, 1
    %v174 = vmax.f32 %v172, %v173
    %v175 = vsub.f32 %v131, %v167
    %v176 = vsub.f32 %v132, %v174
    %v177 = vmul.f32 %v153, 1.442695
    %v178 = vpow.pop %v177
    %v179 = vmul.f32 %v154, 1.442695
    %v180 = vpow.pop %v179
    %v181 = vsel %vm82, %v178, 0.0
    %182 = vadd.xlane.f32.xlu0 %v181
    %v183 = vpop.xlane.xlu0 %182
    %v184 = vsel %vm82, %v180, 0.0
    %185 = vadd.xlane.f32.xlu0 %v184
    %v186 = vpop.xlane.xlu0 %185
    %v187 = vsel %vm82, %v183, 0.0
    %v188 = vrot.slane %v187, 4
    %v189 = vadd.f32 %v187, %v188
    %v190 = vrot.slane %v189, 2
    %v191 = vadd.f32 %v189, %v190
    %v192 = vrot.slane %v191, 1
    %v193 = vadd.f32 %v191, %v192
    %v194 = vsel %vm82, %v186, 0.0
    %v195 = vrot.slane %v194, 4
    %v196 = vadd.f32 %v194, %v195
    %v197 = vrot.slane %v196, 2
    %v198 = vadd.f32 %v196, %v197
    %v199 = vrot.slane %v198, 1
    %v200 = vadd.f32 %v198, %v199
    %v201 = vmul.f32 %v175, 1.442695
    %v202 = vpow.pop %v201
    %v203 = vmul.f32 %v176, 1.442695
    %v204 = vpow.pop %v203
    %v205 = vsel %vm82, %v202, 0.0
    %206 = vadd.xlane.f32.xlu0 %v205
    %v207 = vpop.xlane.xlu0 %206
    %v208 = vsel %vm82, %v204, 0.0
    %209 = vadd.xlane.f32.xlu0 %v208
    %v210 = vpop.xlane.xlu0 %209
    %v211 = vsel %vm82, %v207, 0.0
    %v212 = vrot.slane %v211, 4
    %v213 = vadd.f32 %v211, %v212
    %v214 = vrot.slane %v213, 2
    %v215 = vadd.f32 %v213, %v214
    %v216 = vrot.slane %v215, 1
    %v217 = vadd.f32 %v215, %v216
    %v218 = vsel %vm82, %v210, 0.0
    %v219 = vrot.slane %v218, 4
    %v220 = vadd.f32 %v218, %v219
    %v221 = vrot.slane %v220, 2
    %v222 = vadd.f32 %v220, %v221
    %v223 = vrot.slane %v222, 1
    %v224 = vadd.f32 %v222, %v223
    %v225 = vsub.f32 %v153, %v175
    %v226 = vsub.f32 %v154, %v176
    %v227 = vmul.f32 %v178, %v225
    %v228 = vmul.f32 %v180, %v226
    %v229 = vsel %vm82, %v227, 0.0
    %230 = vadd.xlane.f32.xlu0 %v229
    %v231 = vpop.xlane.xlu0 %230
    %v232 = vsel %vm82, %v228, 0.0
    %233 = vadd.xlane.f32.xlu0 %v232
    %v234 = vpop.xlane.xlu0 %233
    %v235 = vsel %vm82, %v231, 0.0
    %v236 = vrot.slane %v235, 4
    %v237 = vadd.f32 %v235, %v236
    %v238 = vrot.slane %v237, 2
    %v239 = vadd.f32 %v237, %v238
    %v240 = vrot.slane %v239, 1
    %v241 = vadd.f32 %v239, %v240
    %v242 = vsel %vm82, %v234, 0.0
    %v243 = vrot.slane %v242, 4
    %v244 = vadd.f32 %v242, %v243
    %v245 = vrot.slane %v244, 2
    %v246 = vadd.f32 %v244, %v245
    %v247 = vrot.slane %v246, 1
    %v248 = vadd.f32 %v246, %v247
    %v249 = vrcp.pop %v193
    %v250 = vmul.f32 %v241, %v249
    %v251 = vrcp.pop %v200
    %v252 = vmul.f32 %v248, %v251
    %v253 = vmul.f32 %v217, %v249
    %v254 = vmul.f32 %v224, %v251
    %v255 = vlog2.pop %v253
    %v256 = vmul.f32 %v255, 0.6931472
    %v257 = vlog2.pop %v254
    %v258 = vmul.f32 %v257, 0.6931472
    %v259 = vadd.f32 %v250, %v256
    %v260 = vadd.f32 %v252, %v258
    %v261 = vadd.f32 %v259, %v260
    %v262 = vmul.f32 %v261, %v74
    %v263 = vadd.f32 %v262, 0.0
    %v264 = vld [vmem:[%s2] sm:$0x3]
    %v265 = vld [vmem:[%s2 + $0x2] sm:$0x3]
    %v266 = vld [vmem:[%s4] sm:$0x3]
    %v267 = vld [vmem:[%s4 + $0x2] sm:$0x3]
    %v268 = vmul.f32 %v264, %v264
    %v269 = vmul.f32 %v265, %v265
    %v270 = vsel %vm82, %v268, 0.0
    %271 = vadd.xlane.f32.xlu0 %v270
    %v272 = vpop.xlane.xlu0 %271
    %v273 = vsel %vm82, %v269, 0.0
    %274 = vadd.xlane.f32.xlu0 %v273
    %v275 = vpop.xlane.xlu0 %274
    %v276 = vsel %vm82, %v272, 0.0
    %v277 = vrot.slane %v276, 4
    %v278 = vadd.f32 %v276, %v277
    %v279 = vrot.slane %v278, 2
    %v280 = vadd.f32 %v278, %v279
    %v281 = vrot.slane %v280, 1
    %v282 = vadd.f32 %v280, %v281
    %v283 = vsel %vm82, %v275, 0.0
    %v284 = vrot.slane %v283, 4
    %v285 = vadd.f32 %v283, %v284
    %v286 = vrot.slane %v285, 2
    %v287 = vadd.f32 %v285, %v286
    %v288 = vrot.slane %v287, 1
    %v289 = vadd.f32 %v287, %v288
    %v290 = vadd.f32 %v282, %v289
    %v291 = vrsqrt.pop %v290
    %v292 = vmul.f32 %v264, %v291
    %v293 = vmul.f32 %v265, %v291
    %v294 = vmul.f32 %v266, %v266
    %v295 = vmul.f32 %v267, %v267
    %v296 = vsel %vm82, %v294, 0.0
    %297 = vadd.xlane.f32.xlu0 %v296
    %v298 = vpop.xlane.xlu0 %297
    %v299 = vsel %vm82, %v295, 0.0
    %300 = vadd.xlane.f32.xlu0 %v299
    %v301 = vpop.xlane.xlu0 %300
    %v302 = vsel %vm82, %v298, 0.0
    %v303 = vrot.slane %v302, 4
    %v304 = vadd.f32 %v302, %v303
    %v305 = vrot.slane %v304, 2
    %v306 = vadd.f32 %v304, %v305
    %v307 = vrot.slane %v306, 1
    %v308 = vadd.f32 %v306, %v307
    %v309 = vsel %vm82, %v301, 0.0
    %v310 = vrot.slane %v309, 4
    %v311 = vadd.f32 %v309, %v310
    %v312 = vrot.slane %v311, 2
    %v313 = vadd.f32 %v311, %v312
    %v314 = vrot.slane %v313, 1
    %v315 = vadd.f32 %v313, %v314
    %v316 = vadd.f32 %v308, %v315
    %v317 = vrsqrt.pop %v316
    %v318 = vmul.f32 %v266, %v317
    %v319 = vmul.f32 %v267, %v317
    %v320 = vsel %vm82, %v292, -inf
    %321 = vmax.xlane.f32.xlu0 %v320
    %v322 = vpop.xlane.xlu0 %321
    %v323 = vsel %vm82, %v293, -inf
    %324 = vmax.xlane.f32.xlu0 %v323
    %v325 = vpop.xlane.xlu0 %324
    %v326 = vsel %vm82, %v322, -inf
    %v327 = vrot.slane %v326, 4
    %v328 = vmax.f32 %v326, %v327
    %v329 = vrot.slane %v328, 2
    %v330 = vmax.f32 %v328, %v329
    %v331 = vrot.slane %v330, 1
    %v332 = vmax.f32 %v330, %v331
    %v333 = vsel %vm82, %v325, -inf
    %v334 = vrot.slane %v333, 4
    %v335 = vmax.f32 %v333, %v334
    %v336 = vrot.slane %v335, 2
    %v337 = vmax.f32 %v335, %v336
    %v338 = vrot.slane %v337, 1
    %v339 = vmax.f32 %v337, %v338
    %v340 = vsub.f32 %v292, %v332
    %v341 = vsub.f32 %v293, %v339
    %v342 = vsel %vm82, %v318, -inf
    %343 = vmax.xlane.f32.xlu0 %v342
    %v344 = vpop.xlane.xlu0 %343
    %v345 = vsel %vm82, %v319, -inf
    %346 = vmax.xlane.f32.xlu0 %v345
    %v347 = vpop.xlane.xlu0 %346
    %v348 = vsel %vm82, %v344, -inf
    %v349 = vrot.slane %v348, 4
    %v350 = vmax.f32 %v348, %v349
    %v351 = vrot.slane %v350, 2
    %v352 = vmax.f32 %v350, %v351
    %v353 = vrot.slane %v352, 1
    %v354 = vmax.f32 %v352, %v353
    %v355 = vsel %vm82, %v347, -inf
    %v356 = vrot.slane %v355, 4
    %v357 = vmax.f32 %v355, %v356
    %v358 = vrot.slane %v357, 2
    %v359 = vmax.f32 %v357, %v358
    %v360 = vrot.slane %v359, 1
    %v361 = vmax.f32 %v359, %v360
    %v362 = vsub.f32 %v318, %v354
    %v363 = vsub.f32 %v319, %v361
    %v364 = vmul.f32 %v340, 1.442695
    %v365 = vpow.pop %v364
    %v366 = vmul.f32 %v341, 1.442695
    %v367 = vpow.pop %v366
    %v368 = vsel %vm82, %v365, 0.0
    %369 = vadd.xlane.f32.xlu0 %v368
    %v370 = vpop.xlane.xlu0 %369
    %v371 = vsel %vm82, %v367, 0.0
    %372 = vadd.xlane.f32.xlu0 %v371
    %v373 = vpop.xlane.xlu0 %372
    %v374 = vsel %vm82, %v370, 0.0
    %v375 = vrot.slane %v374, 4
    %v376 = vadd.f32 %v374, %v375
    %v377 = vrot.slane %v376, 2
    %v378 = vadd.f32 %v376, %v377
    %v379 = vrot.slane %v378, 1
    %v380 = vadd.f32 %v378, %v379
    %v381 = vsel %vm82, %v373, 0.0
    %v382 = vrot.slane %v381, 4
    %v383 = vadd.f32 %v381, %v382
    %v384 = vrot.slane %v383, 2
    %v385 = vadd.f32 %v383, %v384
    %v386 = vrot.slane %v385, 1
    %v387 = vadd.f32 %v385, %v386
    %v388 = vmul.f32 %v362, 1.442695
    %v389 = vpow.pop %v388
    %v390 = vmul.f32 %v363, 1.442695
    %v391 = vpow.pop %v390
    %v392 = vsel %vm82, %v389, 0.0
    %393 = vadd.xlane.f32.xlu0 %v392
    %v394 = vpop.xlane.xlu0 %393
    %v395 = vsel %vm82, %v391, 0.0
    %396 = vadd.xlane.f32.xlu0 %v395
    %v397 = vpop.xlane.xlu0 %396
    %v398 = vsel %vm82, %v394, 0.0
    %v399 = vrot.slane %v398, 4
    %v400 = vadd.f32 %v398, %v399
    %v401 = vrot.slane %v400, 2
    %v402 = vadd.f32 %v400, %v401
    %v403 = vrot.slane %v402, 1
    %v404 = vadd.f32 %v402, %v403
    %v405 = vsel %vm82, %v397, 0.0
    %v406 = vrot.slane %v405, 4
    %v407 = vadd.f32 %v405, %v406
    %v408 = vrot.slane %v407, 2
    %v409 = vadd.f32 %v407, %v408
    %v410 = vrot.slane %v409, 1
    %v411 = vadd.f32 %v409, %v410
    %v412 = vsub.f32 %v340, %v362
    %v413 = vsub.f32 %v341, %v363
    %v414 = vmul.f32 %v365, %v412
    %v415 = vmul.f32 %v367, %v413
    %v416 = vsel %vm82, %v414, 0.0
    %417 = vadd.xlane.f32.xlu0 %v416
    %v418 = vpop.xlane.xlu0 %417
    %v419 = vsel %vm82, %v415, 0.0
    %420 = vadd.xlane.f32.xlu0 %v419
    %v421 = vpop.xlane.xlu0 %420
    %v422 = vsel %vm82, %v418, 0.0
    %v423 = vrot.slane %v422, 4
    %v424 = vadd.f32 %v422, %v423
    %v425 = vrot.slane %v424, 2
    %v426 = vadd.f32 %v424, %v425
    %v427 = vrot.slane %v426, 1
    %v428 = vadd.f32 %v426, %v427
    %v429 = vsel %vm82, %v421, 0.0
    %v430 = vrot.slane %v429, 4
    %v431 = vadd.f32 %v429, %v430
    %v432 = vrot.slane %v431, 2
    %v433 = vadd.f32 %v431, %v432
    %v434 = vrot.slane %v433, 1
    %v435 = vadd.f32 %v433, %v434
    %v436 = vrcp.pop %v380
    %v437 = vmul.f32 %v428, %v436
    %v438 = vrcp.pop %v387
    %v439 = vmul.f32 %v435, %v438
    %v440 = vmul.f32 %v404, %v436
    %v441 = vmul.f32 %v411, %v438
    %v442 = vlog2.pop %v440
    %v443 = vmul.f32 %v442, 0.6931472
    %v444 = vlog2.pop %v441
    %v445 = vmul.f32 %v444, 0.6931472
    %v446 = vadd.f32 %v437, %v443
    %v447 = vadd.f32 %v439, %v445
    %v448 = vadd.f32 %v446, %v447
    %v449 = vmul.f32 %v448, %v74
    %v450 = vadd.f32 %v263, %v449
    %s451 = sld [smem:[#allocation2]]
    %s452 = ssub.f32 1.0, %s451
    %v453 = vstv %s452
    %v454 = vmul.f32 %v453, %v450
    %v455 = vstv %s451
    %v456 = vmul.f32 %v455, %v75
    %v457 = vadd.f32 %v454, %v456
    %vm458 = vcmask 0
    %459 = vst.msk [vmem:[#allocation3] sm:$0x1] %vm458, %v457
    // Predicated region
    $region30: #{attention_aware_kd_loss.1} parent=1 // pred_check
      _
    $region31: #{attention_aware_kd_loss.1} parent=1 // pred_check_branch
      %461 = sbr.rel (0) target = $region33
    $region32: #{attention_aware_kd_loss.1} parent=1 // pred_region
      %s463 = ssub.s32 16, 16
      %464 = vsyncadd [#allocation4], %s463
      %s466 = sshll.u32 [#allocation3], 4
      %s467 = int_to_ptr.vmem [resolvable:$true] %s466
      %469 = dma.vmem_to_hbm [thread:$0]  %s467, 16, %s7, [#allocation4]
    $region33: #{attention_aware_kd_loss.1} parent=1 // pred_fallthru
      _
    // Predicated region
    $region34: #{attention_aware_kd_loss.1} parent=1 // pred_check
      _
    $region35: #{attention_aware_kd_loss.1} parent=1 // pred_check_branch
      %471 = sbr.rel (0) target = $region37
    $region36: #{attention_aware_kd_loss.1} parent=1 // pred_region
      %472 = dma.done [#allocation4], 16
    $region37: #{attention_aware_kd_loss.1} parent=1 // pred_fallthru
      _
    %473 = vsyncpa [#allocation4], 1

</llo_original>
